<compile_context>
chip_gen: v6e
topology: v6e:2x2x1
jax: 0.10.0
libtpu: 0.0.40
codegen_flags: <defaults>
</compile_context>

<pallas_src>
import functools

import jax
import jax.numpy as jnp
from jax.experimental import pallas as pl
from jax.experimental.pallas import tpu as pltpu

SUBLANE = 8


def _round_up(n, m):
    return ((n + m - 1) // m) * m


def policy_net_kernel(x_ref, w1_ref, b1_ref, w2_ref, b2_ref, o_ref):
    # Hidden layer: x @ W1 (MXU, f32 accumulation) + bias / ReLU (VPU, f32).
    h = jnp.dot(x_ref[...], w1_ref[...], preferred_element_type=jnp.float32)
    h = jnp.maximum(h + b1_ref[...], 0.0)

    # Output layer.  Cast h to the weight dtype so a bf16 matmul_dtype really
    # feeds the MXU bf16 on both operands (no-op on the default f32 path).
    logits = jnp.dot(h.astype(w2_ref.dtype), w2_ref[...],
                     preferred_element_type=jnp.float32)
    logits = logits + b2_ref[...]

    # Numerically-stable softmax over the (small) action axis, all in f32.
    m = jnp.max(logits, axis=-1, keepdims=True)
    e = jnp.exp(logits - m)
    denom = jnp.sum(e, axis=-1, keepdims=True)
    # EUP approx reciprocal + two Newton steps (cheap VALU ops) ~= exact 1/denom.
    r = pl.reciprocal(denom, approx=True)
    r = r * (2.0 - denom * r)
    r = r * (2.0 - denom * r)
    o_ref[...] = (e * r).astype(o_ref.dtype)


def prepare_params(w1, b1, w2, b2, *, matmul_dtype=jnp.float32):
    """One-time parameter prep (hoisted out of the per-forward hot path).

    w1: [in_dim, hidden]  (pre-transposed vs. torch's [out, in])
    b1: [hidden]
    w2: [hidden, num_actions]
    b2: [num_actions]

    Only matmul operands take matmul_dtype (bf16 useful on v6e/v7x); biases and
    the whole elementwise/softmax path stay f32.
    """
    return dict(
        w1=w1.astype(matmul_dtype),
        b1=b1.reshape(1, -1).astype(jnp.float32),
        w2=w2.astype(matmul_dtype),
        b2=b2.reshape(1, -1).astype(jnp.float32),
    )


@functools.partial(jax.jit, static_argnames=("block_b",))
def policy_net_v2_apply(x, params, *, block_b=2048):
    """PolicyNetV2 forward: softmax(relu(x @ w1 + b1) @ w2 + b2, axis=-1).

    x: [B, in_dim] (f32, or bf16 if the producer already emits bf16).
    """
    B, in_dim = x.shape
    hidden = params["w1"].shape[1]
    num_actions = params["w2"].shape[1]

    # B-tile size: cap at the sublane-rounded batch; keep >= 2 grid steps for
    # moderate batches so both v7x TensorCores get work ("parallel" batch axis).
    bb = max(SUBLANE, min(block_b, _round_up(B, SUBLANE)))
    if B >= 2 * SUBLANE and pl.cdiv(B, bb) < 2:
        bb = _round_up(pl.cdiv(B, 2), SUBLANE)
    nb = pl.cdiv(B, bb)

    def resident(shape):
        # Constant block index -> weight/bias DMA'd once, VMEM-resident across steps.
        return pl.BlockSpec(shape, lambda i: (0,) * len(shape))

    return pl.pallas_call(
        policy_net_kernel,
        out_shape=jax.ShapeDtypeStruct((B, num_actions), jnp.float32),
        grid=(nb,),
        in_specs=[
            pl.BlockSpec((bb, in_dim), lambda i: (i, 0)),   # x streams per B-tile
            resident((in_dim, hidden)),                     # W1
            resident((1, hidden)),                          # b1
            resident((hidden, num_actions)),                # W2
            resident((1, num_actions)),                     # b2
        ],
        out_specs=pl.BlockSpec((bb, num_actions), lambda i: (i, 0)),
        compiler_params=pltpu.CompilerParams(
            dimension_semantics=("parallel",),              # shard B-tiles across TCs
        ),
    )(x, params["w1"], params["b1"], params["w2"], params["b2"])


def reference(x, w1, b1, w2, b2):
    h = jnp.maximum(x @ w1 + b1, 0.0)
    return jax.nn.softmax(h @ w2 + b2, axis=-1)


if __name__ == "__main__":
    # Module hyper-params (PyTorch defaults): in_dim=50, hidden_size=32, num_actions=2.
    in_dim, hidden, num_actions = 50, 32, 2

    key = jax.random.PRNGKey(0)
    kx, kw1, kb1, kw2, kb2 = jax.random.split(key, 5)

    # Deterministic init mimicking arg.rl_init == 'normal0.1'
    # (PyTorch stores Linear weight as [out, in]; we keep it pre-transposed [in, out]).
    w1 = 0.1 * jax.random.normal(kw1, (in_dim, hidden), dtype=jnp.float32)
    b1 = 0.1 * jax.random.normal(kb1, (hidden,), dtype=jnp.float32)
    w2 = 0.1 * jax.random.normal(kw2, (hidden, num_actions), dtype=jnp.float32)
    b2 = 0.1 * jax.random.normal(kb2, (num_actions,), dtype=jnp.float32)

    params_f32 = prepare_params(w1, b1, w2, b2)                                # done once
    params_bf16 = prepare_params(w1, b1, w2, b2, matmul_dtype=jnp.bfloat16)    # v6e/v7x option

    # Exercise single-tile tiny batch, ragged last tile, and clean multi-tile paths.
    for B in (2, 500, 512):
        x = jax.random.normal(jax.random.fold_in(kx, B), (B, in_dim), dtype=jnp.float32)

        out = jax.block_until_ready(policy_net_v2_apply(x, params_f32))
        ref = jax.block_until_ready(reference(x, w1, b1, w2, b2))

        assert out.shape == (B, num_actions)
        assert jnp.allclose(out, ref, atol=1e-5, rtol=1e-5), f"mismatch vs reference (B={B})"
        assert jnp.allclose(jnp.sum(out, axis=-1), 1.0, atol=1e-5), "softmax rows must sum to 1"

    # bf16 matmul-operand smoke test (looser tolerance: expected precision loss, not a bug).
    xb = jax.random.normal(jax.random.fold_in(kx, 512), (512, in_dim), dtype=jnp.float32)
    out_bf16 = jax.block_until_ready(policy_net_v2_apply(xb, params_bf16))
    ref_bf16 = jax.block_until_ready(reference(xb, w1, b1, w2, b2))
    assert jnp.allclose(out_bf16, ref_bf16, atol=2e-2, rtol=2e-2), "bf16 path mismatch"
    assert jnp.allclose(jnp.sum(out_bf16, axis=-1), 1.0, atol=1e-3), "bf16 softmax rows must sum to 1"

    print("KERNEL_OK")
</pallas_src>

<mosaic_0001>
module attributes {stable_mosaic.version = 11 : i64} {
  func.func @policy_net_kernel(%arg0: i32, %arg1: memref<8x50xf32, #tpu.memory_space<vmem>>, %arg2: memref<50x32xf32, #tpu.memory_space<vmem>>, %arg3: memref<1x32xf32, #tpu.memory_space<vmem>>, %arg4: memref<32x2xf32, #tpu.memory_space<vmem>>, %arg5: memref<1x2xf32, #tpu.memory_space<vmem>>, %arg6: memref<8x2xf32, #tpu.memory_space<vmem>>) attributes {dimension_semantics = [#tpu.dimension_semantics<parallel>], iteration_bounds = array<i64: 1>, scalar_prefetch = 0 : i64, scratch_operands = 0 : i64, tpu.core_type = #tpu.core_type<tc>, window_params = [{transform_indices = @transform_0, window_bounds = array<i64: 8, 50>}, {pipeline_mode = #tpu.pipeline_mode<synchronous>, transform_indices = @transform_1, window_bounds = array<i64: 50, 32>}, {pipeline_mode = #tpu.pipeline_mode<synchronous>, transform_indices = @transform_2, window_bounds = array<i64: 1, 32>}, {pipeline_mode = #tpu.pipeline_mode<synchronous>, transform_indices = @transform_3, window_bounds = array<i64: 32, 2>}, {pipeline_mode = #tpu.pipeline_mode<synchronous>, transform_indices = @transform_4, window_bounds = array<i64: 1, 2>}, {transform_indices = @transform_5, window_bounds = array<i64: 8, 2>}]} {
    %c0 = arith.constant 0 : index
    %c0_0 = arith.constant 0 : index
    %0 = vector.load %arg1[%c0, %c0_0] : memref<8x50xf32, #tpu.memory_space<vmem>>, vector<8x50xf32>
    %c0_1 = arith.constant 0 : index
    %c0_2 = arith.constant 0 : index
    %1 = vector.load %arg2[%c0_1, %c0_2] : memref<50x32xf32, #tpu.memory_space<vmem>>, vector<50x32xf32>
    %cst = arith.constant dense<0.000000e+00> : vector<8x32xf32>
    %2 = tpu.matmul %0, %1, %cst {dimension_numbers = #tpu.dot_dimension_numbers<[1], [0], [0], [1], [0, 0, 1, 1], [], []>} : vector<8x50xf32>, vector<50x32xf32>, vector<8x32xf32> -> vector<8x32xf32>
    %c0_3 = arith.constant 0 : index
    %c0_4 = arith.constant 0 : index
    %3 = vector.load %arg3[%c0_3, %c0_4] : memref<1x32xf32, #tpu.memory_space<vmem>>, vector<1x32xf32>
    %4 = vector.broadcast %3 : vector<1x32xf32> to vector<8x32xf32>
    %5 = arith.addf %2, %4 : vector<8x32xf32>
    %cst_5 = arith.constant 0.000000e+00 : f32
    %6 = vector.broadcast %cst_5 : f32 to vector<8x32xf32>
    %7 = arith.maximumf %5, %6 : vector<8x32xf32>
    %c0_6 = arith.constant 0 : index
    %c0_7 = arith.constant 0 : index
    %8 = vector.load %arg4[%c0_6, %c0_7] : memref<32x2xf32, #tpu.memory_space<vmem>>, vector<32x2xf32>
    %cst_8 = arith.constant dense<0.000000e+00> : vector<8x2xf32>
    %9 = tpu.matmul %7, %8, %cst_8 {dimension_numbers = #tpu.dot_dimension_numbers<[1], [0], [0], [1], [0, 0, 1, 1], [], []>} : vector<8x32xf32>, vector<32x2xf32>, vector<8x2xf32> -> vector<8x2xf32>
    %c0_9 = arith.constant 0 : index
    %c0_10 = arith.constant 0 : index
    %10 = vector.load %arg5[%c0_9, %c0_10] : memref<1x2xf32, #tpu.memory_space<vmem>>, vector<1x2xf32>
    %11 = vector.broadcast %10 : vector<1x2xf32> to vector<8x2xf32>
    %12 = arith.addf %9, %11 : vector<8x2xf32>
    %cst_11 = arith.constant dense<0xFF800000> : vector<8xf32>
    %13 = vector.multi_reduction <maximumf>, %12, %cst_11 [1] : vector<8x2xf32> to vector<8xf32>
    %14 = vector.shape_cast %13 : vector<8xf32> to vector<8x1xf32>
    %15 = vector.broadcast %14 : vector<8x1xf32> to vector<8x2xf32>
    %16 = arith.subf %12, %15 : vector<8x2xf32>
    %17 = math.exp %16 : vector<8x2xf32>
    %cst_12 = arith.constant dense<0.000000e+00> : vector<8xf32>
    %18 = vector.multi_reduction <add>, %17, %cst_12 [1] : vector<8x2xf32> to vector<8xf32>
    %19 = vector.shape_cast %18 : vector<8xf32> to vector<8x1xf32>
    %20 = tpu.reciprocal %19 {approx = true} : vector<8x1xf32> -> vector<8x1xf32>
    %21 = arith.mulf %19, %20 : vector<8x1xf32>
    %cst_13 = arith.constant 2.000000e+00 : f32
    %22 = vector.broadcast %cst_13 : f32 to vector<8x1xf32>
    %23 = arith.subf %22, %21 : vector<8x1xf32>
    %24 = arith.mulf %20, %23 : vector<8x1xf32>
    %25 = arith.mulf %19, %24 : vector<8x1xf32>
    %cst_14 = arith.constant 2.000000e+00 : f32
    %26 = vector.broadcast %cst_14 : f32 to vector<8x1xf32>
    %27 = arith.subf %26, %25 : vector<8x1xf32>
    %28 = arith.mulf %24, %27 : vector<8x1xf32>
    %29 = vector.broadcast %28 : vector<8x1xf32> to vector<8x2xf32>
    %30 = arith.mulf %17, %29 : vector<8x2xf32>
    %c0_15 = arith.constant 0 : index
    %c0_16 = arith.constant 0 : index
    %31 = vector.load %arg6[%c0_15, %c0_16] : memref<8x2xf32, #tpu.memory_space<vmem>>, vector<8x2xf32>
    tpu.vector_store %arg6[%c0_15, %c0_16], %30 {strides = array<i32>} : memref<8x2xf32, #tpu.memory_space<vmem>>, vector<8x2xf32>,
    return
  }
  func.func @transform_0(%arg0: i32) -> (i32, i32) {
    %c0_i32 = arith.constant 0 : i32
    %c0_i32_0 = arith.constant 0 : i32
    return %arg0, %c0_i32 : i32, i32
  }
  func.func @transform_1(%arg0: i32) -> (i32, i32) {
    %c0_i32 = arith.constant 0 : i32
    %c0_i32_0 = arith.constant 0 : i32
    %c0_i32_1 = arith.constant 0 : i32
    return %c0_i32, %c0_i32_0 : i32, i32
  }
  func.func @transform_2(%arg0: i32) -> (i32, i32) {
    %c0_i32 = arith.constant 0 : i32
    %c0_i32_0 = arith.constant 0 : i32
    %c0_i32_1 = arith.constant 0 : i32
    return %c0_i32, %c0_i32_0 : i32, i32
  }
  func.func @transform_3(%arg0: i32) -> (i32, i32) {
    %c0_i32 = arith.constant 0 : i32
    %c0_i32_0 = arith.constant 0 : i32
    %c0_i32_1 = arith.constant 0 : i32
    return %c0_i32, %c0_i32_0 : i32, i32
  }
  func.func @transform_4(%arg0: i32) -> (i32, i32) {
    %c0_i32 = arith.constant 0 : i32
    %c0_i32_0 = arith.constant 0 : i32
    %c0_i32_1 = arith.constant 0 : i32
    return %c0_i32, %c0_i32_0 : i32, i32
  }
  func.func @transform_5(%arg0: i32) -> (i32, i32) {
    %c0_i32 = arith.constant 0 : i32
    %c0_i32_0 = arith.constant 0 : i32
    return %arg0, %c0_i32 : i32, i32
  }
}

</mosaic_0001>

<llo_original>
// kernel: policy_net_v2_apply.1
$region0: #{policy_net_v2_apply.1}
  #allocation0 [shape = 'u32[]', space=smem, size = 0x4, offset = 0x4, fixed_abs, tag = 'smem constant byte address 0x4 - core index']
  #allocation1 [shape = 'u32[144,128]{1,0:T(1,128)}', space=vmem, size = 0x12000, scoped, tag = 'internal scratch']
  %s0 = inlined_call_operand.vmem [shape: f32[2,50], index: 0, kind: input, shape index: {}]
  %s1 = inlined_call_operand.vmem [shape: f32[50,32], index: 1, kind: input, shape index: {}]
  %s2 = inlined_call_operand.vmem [shape: f32[1,32], index: 2, kind: input, shape index: {}]
  %s3 = inlined_call_operand.vmem [shape: f32[32,2], index: 3, kind: input, shape index: {}]
  %s4 = inlined_call_operand.vmem [shape: f32[1,2], index: 4, kind: input, shape index: {}]
  %s5 = inlined_call_operand.hbm [shape: f32[2,2], index: 5, kind: output, shape index: {}]
  %s6 = sld [smem:[#allocation0]]
  $region30: #{policy_net_v2_apply.1} parent=0
    _
  %s8 = ssub.s32 1, %s6
  %s9 = scalar_select 0, %s8, %s6
  $region1: #{policy_net_v2_apply.1} parent=0
    #allocation2 [shape = 'u8[4096]{0}', space=vmem, size = 0x1000, scoped, tag = 'output window, operand 0, single buffered']
    #allocation3 [shape = 's32[1]{0}', space=sflag, size = 0x4, scoped, tag = 'scoped memory for policy_net_v2_apply.1']
    %10 = vsyncpa [#allocation3], 0
    // Predicated region
    $region2: #{policy_net_v2_apply.1} parent=1 // pred_check
      _
    $region3: #{policy_net_v2_apply.1} parent=1 // pred_check_branch
      %12 = sbr.rel (0) target = $region5
    $region4: #{policy_net_v2_apply.1} parent=1 // pred_region
      _
    $region5: #{policy_net_v2_apply.1} parent=1 // pred_fallthru
      _
    // Predicated region
    $region6: #{policy_net_v2_apply.1} parent=1 // pred_check
      _
    $region7: #{policy_net_v2_apply.1} parent=1 // pred_check_branch
      %14 = sbr.rel (0) target = $region9
    $region8: #{policy_net_v2_apply.1} parent=1 // pred_region
      _
    $region9: #{policy_net_v2_apply.1} parent=1 // pred_fallthru
      _
    // Predicated region
    $region10: #{policy_net_v2_apply.1} parent=1 // pred_check
      _
    $region11: #{policy_net_v2_apply.1} parent=1 // pred_check_branch
      %16 = sbr.rel (0) target = $region13
    $region12: #{policy_net_v2_apply.1} parent=1 // pred_region
      _
    $region13: #{policy_net_v2_apply.1} parent=1 // pred_fallthru
      _
    // Predicated region
    $region14: #{policy_net_v2_apply.1} parent=1 // pred_check
      _
    $region15: #{policy_net_v2_apply.1} parent=1 // pred_check_branch
      %18 = sbr.rel (0) target = $region17
    $region16: #{policy_net_v2_apply.1} parent=1 // pred_region
      _
    $region17: #{policy_net_v2_apply.1} parent=1 // pred_fallthru
      _
    // Predicated region
    $region18: #{policy_net_v2_apply.1} parent=1 // pred_check
      _
    $region19: #{policy_net_v2_apply.1} parent=1 // pred_check_branch
      %20 = sbr.rel (0) target = $region21
    $region20: #{policy_net_v2_apply.1} parent=1 // pred_region
      _
    $region21: #{policy_net_v2_apply.1} parent=1 // pred_fallthru
      _
    %v21 = vld [vmem:[%s0] sm:$0xff]
    %v22 = vld [vmem:[%s1] sm:$0xff]
    %v23 = vld [vmem:[%s1 + $0x8] sm:$0xff]
    %v24 = vld [vmem:[%s1 + $0x10] sm:$0xff]
    %v25 = vld [vmem:[%s1 + $0x18] sm:$0xff]
    %v26 = vld [vmem:[%s1 + $0x20] sm:$0xff]
    %v27 = vld [vmem:[%s1 + $0x28] sm:$0xff]
    %v28 = vld [vmem:[%s1 + $0x30] sm:$0x3]
    %v29 = vld [vmem:[%s2] sm:$0x1]
    %v31 = vlaneseq
    %v32 = vshrl.u32 %v31, 7
    %v33 = vsub.s32 0, %v32
    %v34 = vrot.slane %v29, %v33
    %vm36 = vcmask 408576
    %v38 = vsel %vm36, %v21, 0
    %vm40 = vcmask 1041408
    %v42 = vsel %vm40, %v28, 0
    %44 = vmatprep.subr.mxu0 0.0
    %45 = vmatpush1.msra.mxu0 0.0
    %46 = vmatprep.subr.mxu0 0.0
    %47 = vmatpush1.msra.mxu0 0.0
    %48 = vmatprep.subr.mxu0 0.0
    %49 = vmatpush1.msra.mxu0 0.0
    %50 = vmatprep.subr.mxu0 0.0
    %51 = vmatpush1.msra.mxu0 0.0
    %52 = vmatprep.subr.mxu0 0.0
    %53 = vmatpush1.msra.mxu0 0.0
    %54 = vmatprep.subr.mxu0 0.0
    %55 = vmatpush1.msra.mxu0 0.0
    %56 = vmatprep.subr.mxu0 0.0
    %57 = vmatpush1.msra.mxu0 0.0
    %58 = vmatprep.subr.mxu0 0.0
    %59 = vmatpush1.msra.mxu0 0.0
    %60 = vmatprep.subr.mxu0 0.0
    %61 = vmatpush1.msra.mxu0 0.0
    %62 = vmatprep.subr.mxu0 0.0
    %63 = vmatpush1.msra.mxu0 %v42
    %64 = vmatprep.subr.mxu0 0.0
    %65 = vmatpush1.msra.mxu0 %v27
    %66 = vmatprep.subr.mxu0 0.0
    %67 = vmatpush1.msra.mxu0 %v26
    %68 = vmatprep.subr.mxu0 0.0
    %69 = vmatpush1.msra.mxu0 %v25
    %70 = vmatprep.subr.mxu0 0.0
    %71 = vmatpush1.msra.mxu0 %v24
    %72 = vmatprep.subr.mxu0 0.0
    %73 = vmatpush1.msra.mxu0 %v23
    %74 = vmatprep.subr.mxu0 0.0
    %75 = vmatpush1.msra.mxu0 %v22
    %76 = vmatprep.subr.mxu0 0.0
    %77 = vmatpush2.msra.mxu0 0.0
    %78 = vmatprep.subr.mxu0 0.0
    %79 = vmatpush2.msra.mxu0 0.0
    %80 = vmatprep.subr.mxu0 0.0
    %81 = vmatpush2.msra.mxu0 0.0
    %82 = vmatprep.subr.mxu0 0.0
    %83 = vmatpush2.msra.mxu0 0.0
    %84 = vmatprep.subr.mxu0 0.0
    %85 = vmatpush2.msra.mxu0 0.0
    %86 = vmatprep.subr.mxu0 0.0
    %87 = vmatpush2.msra.mxu0 0.0
    %88 = vmatprep.subr.mxu0 0.0
    %89 = vmatpush2.msra.mxu0 0.0
    %90 = vmatprep.subr.mxu0 0.0
    %91 = vmatpush2.msra.mxu0 0.0
    %92 = vmatprep.subr.mxu0 0.0
    %93 = vmatpush2.msra.mxu0 0.0
    %94 = vmatprep.subr.mxu0 0.0
    %95 = vmatpush2.msra.mxu0 0.0
    %96 = vmatprep.subr.mxu0 0.0
    %97 = vmatpush2.msra.mxu0 0.0
    %98 = vmatprep.subr.mxu0 0.0
    %99 = vmatpush2.msra.mxu0 0.0
    %100 = vmatprep.subr.mxu0 0.0
    %101 = vmatpush2.msra.mxu0 0.0
    %102 = vmatprep.subr.mxu0 0.0
    %103 = vmatpush2.msra.mxu0 0.0
    %104 = vmatprep.subr.mxu0 0.0
    %105 = vmatpush2.msra.mxu0 0.0
    %106 = vmatprep.subr.mxu0 0.0
    %107 = vmatpush2.msra.mxu0 0.0
    %108 = vmatprep.mubr.f32.mxu0 0.0
    %109 = vmatmul.mubr.f32.gmra.mxu0 %v38
    %v110 = vpop.f32.mrf.mxu0
    %v111 = vadd.f32 %v34, %v110
    %v112 = vpop.f32.mrf.mxu0
    %113 = vdwg.mxu0
    %v114 = vmax.f32 %v111, 0.0
    %v115 = vld [vmem:[%s3] sm:$0xff]
    %v116 = vld [vmem:[%s3 + $0x8] sm:$0xff]
    %v117 = vld [vmem:[%s3 + $0x10] sm:$0xff]
    %v118 = vld [vmem:[%s3 + $0x18] sm:$0xff]
    %v119 = vld [vmem:[%s4] sm:$0x1]
    %v121 = vlaneseq
    %v122 = vshrl.u32 %v121, 7
    %v123 = vsub.s32 0, %v122
    %v124 = vrot.slane %v119, %v123
    %vm126 = vcmask 261120
    %v128 = vsel %vm126, %v114, 0
    %130 = vmatprep.subr.mxu0 0.0
    %131 = vmatpush1.msra.mxu0 0.0
    %132 = vmatprep.subr.mxu0 0.0
    %133 = vmatpush1.msra.mxu0 0.0
    %134 = vmatprep.subr.mxu0 0.0
    %135 = vmatpush1.msra.mxu0 0.0
    %136 = vmatprep.subr.mxu0 0.0
    %137 = vmatpush1.msra.mxu0 0.0
    %138 = vmatprep.subr.mxu0 0.0
    %139 = vmatpush1.msra.mxu0 0.0
    %140 = vmatprep.subr.mxu0 0.0
    %141 = vmatpush1.msra.mxu0 0.0
    %142 = vmatprep.subr.mxu0 0.0
    %143 = vmatpush1.msra.mxu0 0.0
    %144 = vmatprep.subr.mxu0 0.0
    %145 = vmatpush1.msra.mxu0 0.0
    %146 = vmatprep.subr.mxu0 0.0
    %147 = vmatpush1.msra.mxu0 0.0
    %148 = vmatprep.subr.mxu0 0.0
    %149 = vmatpush1.msra.mxu0 0.0
    %150 = vmatprep.subr.mxu0 0.0
    %151 = vmatpush1.msra.mxu0 0.0
    %152 = vmatprep.subr.mxu0 0.0
    %153 = vmatpush1.msra.mxu0 0.0
    %154 = vmatprep.subr.mxu0 0.0
    %155 = vmatpush1.msra.mxu0 %v118
    %156 = vmatprep.subr.mxu0 0.0
    %157 = vmatpush1.msra.mxu0 %v117
    %158 = vmatprep.subr.mxu0 0.0
    %159 = vmatpush1.msra.mxu0 %v116
    %160 = vmatprep.subr.mxu0 0.0
    %161 = vmatpush1.msra.mxu0 %v115
    %162 = vmatprep.subr.mxu0 0.0
    %163 = vmatpush2.msra.mxu0 0.0
    %164 = vmatprep.subr.mxu0 0.0
    %165 = vmatpush2.msra.mxu0 0.0
    %166 = vmatprep.subr.mxu0 0.0
    %167 = vmatpush2.msra.mxu0 0.0
    %168 = vmatprep.subr.mxu0 0.0
    %169 = vmatpush2.msra.mxu0 0.0
    %170 = vmatprep.subr.mxu0 0.0
    %171 = vmatpush2.msra.mxu0 0.0
    %172 = vmatprep.subr.mxu0 0.0
    %173 = vmatpush2.msra.mxu0 0.0
    %174 = vmatprep.subr.mxu0 0.0
    %175 = vmatpush2.msra.mxu0 0.0
    %176 = vmatprep.subr.mxu0 0.0
    %177 = vmatpush2.msra.mxu0 0.0
    %178 = vmatprep.subr.mxu0 0.0
    %179 = vmatpush2.msra.mxu0 0.0
    %180 = vmatprep.subr.mxu0 0.0
    %181 = vmatpush2.msra.mxu0 0.0
    %182 = vmatprep.subr.mxu0 0.0
    %183 = vmatpush2.msra.mxu0 0.0
    %184 = vmatprep.subr.mxu0 0.0
    %185 = vmatpush2.msra.mxu0 0.0
    %186 = vmatprep.subr.mxu0 0.0
    %187 = vmatpush2.msra.mxu0 0.0
    %188 = vmatprep.subr.mxu0 0.0
    %189 = vmatpush2.msra.mxu0 0.0
    %190 = vmatprep.subr.mxu0 0.0
    %191 = vmatpush2.msra.mxu0 0.0
    %192 = vmatprep.subr.mxu0 0.0
    %193 = vmatpush2.msra.mxu0 0.0
    %194 = vmatprep.mubr.f32.mxu0 0.0
    %195 = vmatmul.mubr.f32.gmra.mxu0 %v128
    %v196 = vpop.f32.mrf.mxu0
    %v197 = vadd.f32 %v124, %v196
    %v198 = vpop.f32.mrf.mxu0
    %199 = vdwg.mxu0
    %vm200 = vcmask 15360
    %v201 = vsel %vm200, %v197, -inf
    %202 = vmax.xlane.f32.xlu0 %v201
    %v203 = vpop.xlane.xlu0 %202
    %v204 = vsub.f32 %v197, %v203
    %v205 = vmul.f32 %v204, 1.442695
    %v206 = vpow.pop %v205
    %v207 = vsel %vm200, %v206, 0.0
    %208 = vadd.xlane.f32.xlu0 %v207
    %v209 = vpop.xlane.xlu0 %208
    %v210 = vrcp.pop %v209
    %v211 = vmul.f32 %v209, %v210
    %v212 = vsub.f32 2.0, %v211
    %v213 = vmul.f32 %v210, %v212
    %v214 = vmul.f32 %v209, %v213
    %v215 = vsub.f32 2.0, %v214
    %v216 = vmul.f32 %v213, %v215
    %v217 = vmul.f32 %v206, %v216
    %218 = vst.msk [vmem:[#allocation2] sm:$0xff] %vm200, %v217
    // Predicated region
    $region22: #{policy_net_v2_apply.1} parent=1 // pred_check
      _
    $region23: #{policy_net_v2_apply.1} parent=1 // pred_check_branch
      %220 = sbr.rel (0) target = $region25
    $region24: #{policy_net_v2_apply.1} parent=1 // pred_region
      %s222 = ssub.s32 128, 32
      %223 = vsyncadd [#allocation3], %s222
      %s224 = sshll.u32 [#allocation2], 4
      %s225 = int_to_ptr.vmem [resolvable:$true] %s224
      %230 = dma.vmem_to_hbm [thread:$0]  %s225, 32, %s5, [#allocation3], 32, 32, 2
    $region25: #{policy_net_v2_apply.1} parent=1 // pred_fallthru
      _
    // Predicated region
    $region26: #{policy_net_v2_apply.1} parent=1 // pred_check
      _
    $region27: #{policy_net_v2_apply.1} parent=1 // pred_check_branch
      %232 = sbr.rel (0) target = $region29
    $region28: #{policy_net_v2_apply.1} parent=1 // pred_region
      %233 = dma.done [#allocation3], 128
    $region29: #{policy_net_v2_apply.1} parent=1 // pred_fallthru
      _
    %234 = vsyncpa [#allocation3], 1

</llo_original>
